<compile_context>
chip_gen: v6e
topology: v6e:2x2x1
jax: 0.10.0
libtpu: 0.0.40
codegen_flags: <defaults>
</compile_context>

<pallas_src>
import functools

import jax
import jax.numpy as jnp
from jax.experimental import pallas as pl
from jax.experimental.pallas import tpu as pltpu


def _ce_label_smooth_kernel(x_ref, t_ref, part_ref, *,
                            num_classes, epsilon, block_rows, total_rows,
                            mask_tail):
    i = pl.program_id(0)

    x = x_ref[...].astype(jnp.float32)          # (TB, K) logits block (cast in VMEM)
    t = t_ref[...]                              # (TB, 1) int32 labels
    tb, k = x.shape

    # Numerically-stable log-sum-exp pieces (no full log_probs materialization).
    m = jnp.max(x, axis=1, keepdims=True)                                # (TB, 1)
    lse_m = m + jnp.log(jnp.sum(jnp.exp(x - m), axis=1, keepdims=True))  # (TB, 1)

    # Target logit via integer lane-iota compare (replaces torch's scatter_ one-hot).
    lane_ids = jax.lax.broadcasted_iota(jnp.int32, (tb, k), 1)
    x_t = jnp.sum(jnp.where(lane_ids == t, x, 0.0), axis=1, keepdims=True)   # (TB, 1)
    sum_x = jnp.sum(x, axis=1, keepdims=True)                                # (TB, 1)

    lp_target = x_t - lse_m                                   # log_probs[b, t_b]
    lp_sum = sum_x - jnp.float32(num_classes) * lse_m         # sum_k log_probs[b, k]

    per_sample = -((1.0 - epsilon) * lp_target
                   + (epsilon / num_classes) * lp_sum)        # (TB, 1)

    if mask_tail:
        # Tail block: rows past the true batch size hold padding garbage; the
        # reductions above are per-row, so a (TB,1) select is all that's needed.
        row_ids = i * block_rows + jax.lax.broadcasted_iota(jnp.int32, (tb, 1), 0)
        per_sample = jnp.where(row_ids < total_rows, per_sample, 0.0)

    # Lane-dense per-block partial (no cross-iteration accumulator -> "parallel").
    part_ref[...] = jnp.full(part_ref.shape, jnp.sum(per_sample), dtype=jnp.float32)


def cross_entropy_label_smooth(inputs, targets, num_classes, epsilon=0.1,
                               block_rows=None,
                               buffer_budget_bytes=16 * 1024 * 1024):
    """JAX/Pallas equivalent of CrossEntropyLabelSmooth.forward (scalar loss).

    `inputs` is consumed in its native dtype (f32/bf16/...); the f32 upcast
    happens per block inside the kernel.
    """
    b, k = inputs.shape
    assert k == num_classes, (k, num_classes)
    t2d = targets.astype(jnp.int32).reshape(b, 1)

    itemsize = jnp.dtype(inputs.dtype).itemsize
    row_align = max(8, 32 // itemsize)          # 8 for f32, 16 for bf16, 32 for int8

    if block_rows is None:
        rows_fit = buffer_budget_bytes // max(1, k * itemsize)
        rows_fit = max(row_align, (rows_fit // row_align) * row_align)
        # Whole batch in one block when it fits (block == full dim is always legal),
        # else the largest aligned block within the per-buffer VMEM budget.
        block_rows = b if b <= rows_fit else rows_fit
    # TODO(synk): for vocab-scale num_classes add a K grid axis (last,
    # "arbitrary") with an online log-sum-exp instead of shrinking block_rows
    # down to the 8/16-row floor.

    grid_size = pl.cdiv(b, block_rows)
    mask_tail = (b % block_rows) != 0

    block_bytes = block_rows * k * itemsize
    vmem_limit = int(min(96 * 2**20, max(16 * 2**20, 2 * block_bytes + 4 * 2**20)))

    kernel = functools.partial(
        _ce_label_smooth_kernel,
        num_classes=num_classes,
        epsilon=float(epsilon),
        block_rows=block_rows,
        total_rows=b,
        mask_tail=mask_tail,
    )

    partials = pl.pallas_call(
        kernel,
        out_shape=jax.ShapeDtypeStruct((grid_size, 8, 128), jnp.float32),
        grid_spec=pltpu.PrefetchScalarGridSpec(
            num_scalar_prefetch=0,
            grid=(grid_size,),
            in_specs=[
                pl.BlockSpec((block_rows, k), lambda i: (i, 0)),   # logits (native dtype)
                pl.BlockSpec((block_rows, 1), lambda i: (i, 0)),   # int32 labels
            ],
            out_specs=pl.BlockSpec((1, 8, 128), lambda i: (i, 0, 0)),
        ),
        compiler_params=pltpu.CompilerParams(
            dimension_semantics=("parallel",),
            vmem_limit_bytes=vmem_limit,
        ),
    )(inputs, t2d)

    # Sum the per-block partials and apply the 1/B scale exactly once.
    return jnp.sum(partials[:, 0, 0]) / b


def _reference(inputs, targets, num_classes, epsilon=0.1):
    """Pure-JAX mirror of the PyTorch module, for verification."""
    log_probs = jax.nn.log_softmax(inputs.astype(jnp.float32), axis=1)
    onehot = jax.nn.one_hot(targets, num_classes, dtype=jnp.float32)
    smoothed = (1.0 - epsilon) * onehot + epsilon / num_classes
    return jnp.sum(jnp.mean(-smoothed * log_probs, axis=0))


if __name__ == "__main__":
    key = jax.random.PRNGKey(0)
    kx, kt = jax.random.split(key)

    B, K = 8, 32  # batch of 8 logits rows, 32 classes
    x = jax.random.normal(kx, (B, K), dtype=jnp.float32) * 2.0
    targets = jax.random.randint(kt, (B,), 0, K, dtype=jnp.int32)

    # f32 path
    loss = cross_entropy_label_smooth(x, targets, num_classes=K, epsilon=0.1)
    jax.block_until_ready(loss)
    ref = _reference(x, targets, K, epsilon=0.1)
    assert jnp.allclose(loss, ref, atol=1e-5, rtol=1e-5), (loss, ref)

    # native bf16 path: no wrapper upcast, cast happens per-block in VMEM
    x_bf16 = x.astype(jnp.bfloat16)
    loss_bf16 = cross_entropy_label_smooth(x_bf16, targets, num_classes=K,
                                           epsilon=0.1)
    jax.block_until_ready(loss_bf16)
    ref_bf16 = _reference(x_bf16, targets, K, epsilon=0.1)
    assert jnp.allclose(loss_bf16, ref_bf16, atol=1e-4, rtol=1e-4), (loss_bf16,
                                                                     ref_bf16)

    print("KERNEL_OK")
</pallas_src>

<mosaic_0001>
module attributes {stable_mosaic.version = 11 : i64} {
  func.func @_ce_label_smooth_kernel(%arg0: i32, %arg1: memref<8x32xf32, #tpu.memory_space<vmem>>, %arg2: memref<8x1xi32, #tpu.memory_space<vmem>>, %arg3: memref<1x8x128xf32, #tpu.memory_space<vmem>>) attributes {dimension_semantics = [#tpu.dimension_semantics<parallel>], iteration_bounds = array<i64: 1>, scalar_prefetch = 0 : i64, scratch_operands = 0 : i64, tpu.core_type = #tpu.core_type<tc>, window_params = [{transform_indices = @transform_0, window_bounds = array<i64: 8, 32>}, {transform_indices = @transform_1, window_bounds = array<i64: 8, 1>}, {transform_indices = @transform_2, window_bounds = array<i64: 1, 8, 128>}]} {
    %c0 = arith.constant 0 : index
    %c0_0 = arith.constant 0 : index
    %0 = vector.load %arg1[%c0, %c0_0] : memref<8x32xf32, #tpu.memory_space<vmem>>, vector<8x32xf32>
    %c0_1 = arith.constant 0 : index
    %c0_2 = arith.constant 0 : index
    %1 = vector.load %arg2[%c0_1, %c0_2] : memref<8x1xi32, #tpu.memory_space<vmem>>, vector<8x1xi32>
    %cst = arith.constant dense<0xFF800000> : vector<8xf32>
    %2 = vector.multi_reduction <maximumf>, %0, %cst [1] : vector<8x32xf32> to vector<8xf32>
    %3 = vector.shape_cast %2 : vector<8xf32> to vector<8x1xf32>
    %4 = vector.broadcast %3 : vector<8x1xf32> to vector<8x32xf32>
    %5 = arith.subf %0, %4 : vector<8x32xf32>
    %6 = math.exp %5 : vector<8x32xf32>
    %cst_3 = arith.constant dense<0.000000e+00> : vector<8xf32>
    %7 = vector.multi_reduction <add>, %6, %cst_3 [1] : vector<8x32xf32> to vector<8xf32>
    %8 = vector.shape_cast %7 : vector<8xf32> to vector<8x1xf32>
    %9 = math.log %8 : vector<8x1xf32>
    %10 = arith.addf %3, %9 : vector<8x1xf32>
    %11 = tpu.iota {dimensions = array<i32: 1>} : vector<8x32xi32>
    %12 = vector.broadcast %1 : vector<8x1xi32> to vector<8x32xi32>
    %13 = arith.cmpi eq, %11, %12 : vector<8x32xi32>
    %cst_4 = arith.constant 0.000000e+00 : f32
    %14 = vector.broadcast %cst_4 : f32 to vector<8x32xf32>
    %15 = arith.select %13, %0, %14 : vector<8x32xi1>, vector<8x32xf32>
    %cst_5 = arith.constant dense<0.000000e+00> : vector<8xf32>
    %16 = vector.multi_reduction <add>, %15, %cst_5 [1] : vector<8x32xf32> to vector<8xf32>
    %17 = vector.shape_cast %16 : vector<8xf32> to vector<8x1xf32>
    %cst_6 = arith.constant dense<0.000000e+00> : vector<8xf32>
    %18 = vector.multi_reduction <add>, %0, %cst_6 [1] : vector<8x32xf32> to vector<8xf32>
    %19 = vector.shape_cast %18 : vector<8xf32> to vector<8x1xf32>
    %20 = arith.subf %17, %10 : vector<8x1xf32>
    %cst_7 = arith.constant 3.200000e+01 : f32
    %21 = vector.broadcast %cst_7 : f32 to vector<8x1xf32>
    %22 = arith.mulf %21, %10 : vector<8x1xf32>
    %23 = arith.subf %19, %22 : vector<8x1xf32>
    %cst_8 = arith.constant 0.899999976 : f32
    %24 = vector.broadcast %cst_8 : f32 to vector<8x1xf32>
    %25 = arith.mulf %24, %20 : vector<8x1xf32>
    %cst_9 = arith.constant 3.125000e-03 : f32
    %26 = vector.broadcast %cst_9 : f32 to vector<8x1xf32>
    %27 = arith.mulf %26, %23 : vector<8x1xf32>
    %28 = arith.addf %25, %27 : vector<8x1xf32>
    %cst_10 = arith.constant 0.000000e+00 : f32
    %29 = vector.broadcast %cst_10 : f32 to vector<8x1xf32>
    %30 = arith.subf %29, %28 : vector<8x1xf32>
    %31 = vector.shape_cast %30 : vector<8x1xf32> to vector<1x8x1xf32>
    %cst_11 = arith.constant dense<0.000000e+00> : vector<1xf32>
    %32 = vector.multi_reduction <add>, %31, %cst_11 [1, 2] : vector<1x8x1xf32> to vector<1xf32>
    %33 = vector.shape_cast %32 : vector<1xf32> to vector<1x1x1xf32>
    %34 = vector.extract %33[0, 0, 0] : f32 from vector<1x1x1xf32>
    %35 = vector.broadcast %34 : f32 to vector<1x8x128xf32>
    %c0_12 = arith.constant 0 : index
    %c0_13 = arith.constant 0 : index
    %c0_14 = arith.constant 0 : index
    %36 = vector.load %arg3[%c0_12, %c0_13, %c0_14] : memref<1x8x128xf32, #tpu.memory_space<vmem>>, vector<1x8x128xf32>
    tpu.vector_store %arg3[%c0_12, %c0_13, %c0_14], %35 {strides = array<i32>} : memref<1x8x128xf32, #tpu.memory_space<vmem>>, vector<1x8x128xf32>,
    return
  }
  func.func @transform_0(%arg0: i32) -> (i32, i32) {
    %c0_i32 = arith.constant 0 : i32
    %c0_i32_0 = arith.constant 0 : i32
    return %arg0, %c0_i32 : i32, i32
  }
  func.func @transform_1(%arg0: i32) -> (i32, i32) {
    %c0_i32 = arith.constant 0 : i32
    %c0_i32_0 = arith.constant 0 : i32
    return %arg0, %c0_i32 : i32, i32
  }
  func.func @transform_2(%arg0: i32) -> (i32, i32, i32) {
    %c0_i32 = arith.constant 0 : i32
    %c0_i32_0 = arith.constant 0 : i32
    %c0_i32_1 = arith.constant 0 : i32
    return %arg0, %c0_i32, %c0_i32_0 : i32, i32, i32
  }
}

</mosaic_0001>

<llo_original>
// kernel: tpu_custom_call.1
$region0: #{tpu_custom_call.1}
  #allocation0 [shape = 'u32[]', space=smem, size = 0x4, offset = 0x4, fixed_abs, tag = 'smem constant byte address 0x4 - core index']
  #allocation1 [shape = 'u32[144,128]{1,0:T(1,128)}', space=vmem, size = 0x12000, scoped, tag = 'internal scratch']
  %s0 = inlined_call_operand.vmem [shape: f32[8,32], index: 0, kind: input, shape index: {}]
  %s1 = inlined_call_operand.vmem [shape: s32[8,1], index: 1, kind: input, shape index: {}]
  %s2 = inlined_call_operand.hbm [shape: f32[1,8,128], index: 2, kind: output, shape index: {}]
  %s3 = sld [smem:[#allocation0]]
  $region18: #{tpu_custom_call.1} parent=0
    _
  %s5 = ssub.s32 1, %s3
  %s6 = scalar_select 0, %s5, %s3
  $region1: #{tpu_custom_call.1} parent=0
    #allocation2 [shape = 'u8[4096]{0}', space=vmem, size = 0x1000, scoped, tag = 'output window, operand 0, single buffered']
    #allocation3 [shape = 's32[1]{0}', space=sflag, size = 0x4, scoped, tag = 'scoped memory for tpu_custom_call.1']
    %7 = vsyncpa [#allocation3], 0
    // Predicated region
    $region2: #{tpu_custom_call.1} parent=1 // pred_check
      _
    $region3: #{tpu_custom_call.1} parent=1 // pred_check_branch
      %9 = sbr.rel (0) target = $region5
    $region4: #{tpu_custom_call.1} parent=1 // pred_region
      _
    $region5: #{tpu_custom_call.1} parent=1 // pred_fallthru
      _
    // Predicated region
    $region6: #{tpu_custom_call.1} parent=1 // pred_check
      _
    $region7: #{tpu_custom_call.1} parent=1 // pred_check_branch
      %11 = sbr.rel (0) target = $region9
    $region8: #{tpu_custom_call.1} parent=1 // pred_region
      _
    $region9: #{tpu_custom_call.1} parent=1 // pred_fallthru
      _
    %v12 = vld [vmem:[%s0] sm:$0xff]
    %v13 = vld [vmem:[%s1] sm:$0xff]
    %vm14 = vcmask 261120
    %v15 = vsel %vm14, %v12, -inf
    %16 = vmax.xlane.f32.xlu0 %v15
    %v17 = vpop.xlane.xlu0 %16
    %v18 = vsub.f32 %v12, %v17
    %v19 = vmul.f32 %v18, 1.442695
    %v20 = vpow.pop %v19
    %v21 = vsel %vm14, %v20, 0.0
    %22 = vadd.xlane.f32.xlu0 %v21
    %v23 = vpop.xlane.xlu0 %22
    %v24 = vlog2.pop %v23
    %v25 = vmul.f32 %v24, 0.6931472
    %v26 = vadd.f32 %v17, %v25
    %v27 = vlaneseq
    %v28 = vand.u32 %v27, 127
    %29 = vset.pattern.permute.xlu0 0
    %30 = vperm.xlu0 %29, %v13
    %v31 = vpop.permute.xlu0 %30
    %vm32 = vcmp.eq.s32.totalorder %v28, %v31
    %v33 = vsel %vm32, %v12, 0.0
    %v34 = vsel %vm14, %v33, 0.0
    %35 = vadd.xlane.f32.xlu0 %v34
    %v36 = vpop.xlane.xlu0 %35
    %v37 = vsel %vm14, %v12, 0.0
    %38 = vadd.xlane.f32.xlu0 %v37
    %v39 = vpop.xlane.xlu0 %38
    %v40 = vsub.f32 %v36, %v26
    %v41 = vmul.f32 %v26, 32.0
    %v42 = vsub.f32 %v39, %v41
    %v43 = vmul.f32 %v40, 0.9
    %v44 = vmul.f32 %v42, 0.003125
    %v45 = vadd.f32 %v43, %v44
    %v46 = vsub.f32 0.0, %v45
    %vm47 = vcmask 7168
    %v48 = vsel %vm47, %v46, 0.0
    %49 = vadd.xlane.f32.xlu0 %v48
    %v50 = vpop.xlane.xlu0 %49
    %v51 = vrot.slane %v50, 4
    %v52 = vadd.f32 %v50, %v51
    %v53 = vrot.slane %v52, 2
    %v54 = vadd.f32 %v52, %v53
    %v55 = vrot.slane %v54, 1
    %v56 = vadd.f32 %v54, %v55
    %s57 = vtos %v56
    %v58 = vstv %s57
    %59 = vst [vmem:[#allocation2] sm:$0xff] %v58
    // Predicated region
    $region10: #{tpu_custom_call.1} parent=1 // pred_check
      _
    $region11: #{tpu_custom_call.1} parent=1 // pred_check_branch
      %61 = sbr.rel (0) target = $region13
    $region12: #{tpu_custom_call.1} parent=1 // pred_region
      %s63 = ssub.s32 128, 128
      %64 = vsyncadd [#allocation3], %s63
      %s66 = sshll.u32 [#allocation2], 4
      %s67 = int_to_ptr.vmem [resolvable:$true] %s66
      %69 = dma.vmem_to_hbm [thread:$0]  %s67, 128, %s2, [#allocation3]
    $region13: #{tpu_custom_call.1} parent=1 // pred_fallthru
      _
    // Predicated region
    $region14: #{tpu_custom_call.1} parent=1 // pred_check
      _
    $region15: #{tpu_custom_call.1} parent=1 // pred_check_branch
      %71 = sbr.rel (0) target = $region17
    $region16: #{tpu_custom_call.1} parent=1 // pred_region
      %72 = dma.done [#allocation3], 128
    $region17: #{tpu_custom_call.1} parent=1 // pred_fallthru
      _
    %73 = vsyncpa [#allocation3], 1

</llo_original>
